<compile_context>
chip_gen: v5e
topology: v5e:2x2
jax: 0.10.0
libtpu: 0.0.40
codegen_flags: <defaults>
</compile_context>

<pallas_src>
import functools

import jax
import jax.numpy as jnp
import numpy as np
from jax.experimental import pallas as pl
from jax.experimental.pallas import tpu as pltpu


def _round_up(x, m):
    return (x + m - 1) // m * m


def _encoder_kernel(img_ref, w_ref, b_ref, feat_ref, mean_ref, *,
                    bb, r_pad, r_real, normalize):
    # img_ref : (Bb, R_pad, D_pad)   Bb whole batch elements (zero padded)
    # w_ref   : (D_pad, E_pad)       fc.weight.T, zero padded (VMEM resident)
    # b_ref   : (1, E_pad)           fc.bias, zero padded
    # feat_ref: (Bb, R_pad, E_pad)   (l2-normalized) features
    # mean_ref: (Bb, E_pad)          per-batch mean over the R real regions
    d_pad = img_ref.shape[-1]
    e_pad = w_ref.shape[-1]

    # Fused-M matmul: (Bb*R_pad, D_pad) @ (D_pad, E_pad), f32 MXU accumulation.
    x = img_ref[...].reshape(bb * r_pad, d_pad)
    f = jnp.dot(x, w_ref[...], preferred_element_type=jnp.float32)
    f = f + b_ref[...]                                    # (Bb*R_pad, E_pad)

    if normalize:
        # VSE l2norm: x / (sqrt(sum(x^2, -1)) + eps); reciprocal on the EUP.
        norm = jnp.sqrt(jnp.sum(f * f, axis=-1, keepdims=True)) + 1e-8
        f = f * pl.reciprocal(norm, approx=True)

    f3 = f.reshape(bb, r_pad, e_pad)
    feat_ref[...] = f3.astype(feat_ref.dtype)

    # Per-batch mean over the *real* region rows only (pad rows hold junk:
    # bias / normalized bias). Mask only needed when R was padded.
    if r_pad == r_real:
        mean = jnp.sum(f3, axis=1) * (1.0 / r_real)
    else:
        rid = jax.lax.broadcasted_iota(jnp.int32, (bb, r_pad, 1), 1)
        mean = jnp.sum(jnp.where(rid < r_real, f3, 0.0), axis=1) * (1.0 / r_real)
    mean_ref[...] = mean.astype(mean_ref.dtype)


def encoder_image_precomp(images, weight_t, bias, *, no_imgnorm=False,
                          compute_dtype=jnp.float32, target_rows=512):
    """EncoderImagePrecomp.forward.

    images:   (B, R, D) -- precomputed region features
    weight_t: (D, E)    -- fc.weight.T
    bias:     (E,)      -- fc.bias
    Returns (features (B, R, E) f32, features_mean (B, E) f32).

    compute_dtype=jnp.bfloat16 halves HBM/VMEM traffic for images/weight while
    keeping f32 MXU accumulation, l2norm, and mean.
    """
    B, R, D = images.shape
    E = weight_t.shape[1]

    # Pad to hardware-friendly sizes: lanes (last dim) -> x128, sublanes -> x8.
    R_pad = _round_up(R, 8)
    D_pad = _round_up(D, 128)
    E_pad = _round_up(E, 128)

    # Batch elements per grid step: fill the MXU M dimension (~target_rows rows),
    # but keep the per-step VMEM footprint bounded.
    in_bytes = jnp.dtype(compute_dtype).itemsize
    Bb = max(1, target_rows // R_pad)
    while Bb > 1 and Bb * R_pad * (D_pad * in_bytes + E_pad * 4) > (12 << 20):
        Bb //= 2
    if Bb < B:
        Bb = _round_up(Bb, 8)     # keeps the (Bb, E_pad) mean block sublane aligned
    if Bb >= B:
        Bb, B_pad = B, B
    else:
        B_pad = _round_up(B, Bb)

    images_p = jnp.pad(images, ((0, B_pad - B), (0, R_pad - R), (0, D_pad - D)))
    weight_p = jnp.pad(weight_t, ((0, D_pad - D), (0, E_pad - E)))
    bias_p = jnp.pad(bias, ((0, E_pad - E),)).reshape(1, E_pad).astype(jnp.float32)
    images_p = images_p.astype(compute_dtype)
    weight_p = weight_p.astype(compute_dtype)

    # VMEM budget: double-buffered image/feature/mean blocks + resident weight
    # + headroom, clamped to stay safe on v7x's 64 MiB physical VMEM.
    vmem_est = (2 * (Bb * R_pad * D_pad * in_bytes        # images block (x2 buf)
                     + Bb * R_pad * E_pad * 4             # features block (x2 buf)
                     + Bb * E_pad * 4)                    # mean block (x2 buf)
                + D_pad * E_pad * in_bytes                # resident weight
                + E_pad * 4                               # bias
                + (4 << 20))                              # headroom
    vmem_limit = int(min(max(vmem_est, 32 << 20), 48 << 20))

    kernel = functools.partial(_encoder_kernel, bb=Bb, r_pad=R_pad, r_real=R,
                               normalize=not no_imgnorm)

    feats_p, mean_p = pl.pallas_call(
        kernel,
        out_shape=(
            jax.ShapeDtypeStruct((B_pad, R_pad, E_pad), jnp.float32),
            jax.ShapeDtypeStruct((B_pad, E_pad), jnp.float32),
        ),
        grid=(B_pad // Bb,),
        in_specs=[
            pl.BlockSpec((Bb, R_pad, D_pad), lambda b: (b, 0, 0)),
            pl.BlockSpec((D_pad, E_pad), lambda b: (0, 0)),
            pl.BlockSpec((1, E_pad), lambda b: (0, 0)),
        ],
        out_specs=(
            pl.BlockSpec((Bb, R_pad, E_pad), lambda b: (b, 0, 0)),
            pl.BlockSpec((Bb, E_pad), lambda b: (b, 0)),
        ),
        compiler_params=pltpu.CompilerParams(
            dimension_semantics=("parallel",),
            vmem_limit_bytes=vmem_limit,
        ),
    )(images_p, weight_p, bias_p)

    # TODO(synk): add a K (img_dim) grid axis + f32 accumulator scratch if D grows >~4096.
    return feats_p[:B, :R, :E], mean_p[:B, :E]


def init_params(img_dim, embed_size, key):
    """Xavier-uniform fc.weight (as in EncoderImagePrecomp.init_weights), zero bias."""
    r = np.sqrt(6.0) / np.sqrt(img_dim + embed_size)
    w = jax.random.uniform(key, (embed_size, img_dim), jnp.float32, -r, r)
    return w.T, jnp.zeros((embed_size,), jnp.float32)   # keep W^T: (img_dim, embed_size)


if __name__ == "__main__":
    key = jax.random.PRNGKey(0)
    k_img, k_w = jax.random.split(key)

    B, R, D, E = 2, 8, 32, 32          # batch, regions, img_dim, embed_size
    images = jax.random.normal(k_img, (B, R, D), jnp.float32)
    weight_t, bias = init_params(D, E, k_w)

    # Default path (l2norm on).
    feats, feats_mean = encoder_image_precomp(images, weight_t, bias)
    jax.block_until_ready((feats, feats_mean))
    assert feats.shape == (B, R, E) and feats_mean.shape == (B, E)

    ref = images @ weight_t + bias
    ref_n = ref / (jnp.sqrt(jnp.sum(ref * ref, axis=-1, keepdims=True)) + 1e-8)
    # approx reciprocal on the EUP -> slightly relaxed tolerance.
    np.testing.assert_allclose(np.asarray(feats), np.asarray(ref_n), rtol=5e-3, atol=5e-3)
    np.testing.assert_allclose(np.asarray(feats_mean), np.asarray(jnp.mean(ref_n, axis=1)),
                               rtol=5e-3, atol=5e-3)

    # no_imgnorm=True path.
    feats2, mean2 = encoder_image_precomp(images, weight_t, bias, no_imgnorm=True)
    jax.block_until_ready((feats2, mean2))
    np.testing.assert_allclose(np.asarray(feats2), np.asarray(ref), rtol=1e-4, atol=1e-4)
    np.testing.assert_allclose(np.asarray(mean2), np.asarray(jnp.mean(ref, axis=1)),
                               rtol=1e-4, atol=1e-4)

    # Ragged / non-aligned shapes to exercise padding + masked mean path.
    B2, R2, D2, E2 = 3, 5, 20, 24
    images3 = jax.random.normal(jax.random.PRNGKey(1), (B2, R2, D2), jnp.float32)
    w3, b3 = init_params(D2, E2, jax.random.PRNGKey(2))
    f3, m3 = encoder_image_precomp(images3, w3, b3)
    jax.block_until_ready((f3, m3))
    ref3 = images3 @ w3 + b3
    ref3n = ref3 / (jnp.sqrt(jnp.sum(ref3 * ref3, axis=-1, keepdims=True)) + 1e-8)
    np.testing.assert_allclose(np.asarray(f3), np.asarray(ref3n), rtol=5e-3, atol=5e-3)
    np.testing.assert_allclose(np.asarray(m3), np.asarray(jnp.mean(ref3n, axis=1)),
                               rtol=5e-3, atol=5e-3)

    print("KERNEL_OK")
</pallas_src>

<mosaic_0001>
module attributes {stable_mosaic.version = 11 : i64} {
  func.func @_encoder_kernel(%arg0: i32, %arg1: memref<2x8x128xf32, #tpu.memory_space<vmem>>, %arg2: memref<128x128xf32, #tpu.memory_space<vmem>>, %arg3: memref<1x128xf32, #tpu.memory_space<vmem>>, %arg4: memref<2x8x128xf32, #tpu.memory_space<vmem>>, %arg5: memref<2x128xf32, #tpu.memory_space<vmem>>) attributes {dimension_semantics = [#tpu.dimension_semantics<parallel>], iteration_bounds = array<i64: 1>, scalar_prefetch = 0 : i64, scratch_operands = 0 : i64, tpu.core_type = #tpu.core_type<tc>, window_params = [{transform_indices = @transform_0, window_bounds = array<i64: 2, 8, 128>}, {pipeline_mode = #tpu.pipeline_mode<synchronous>, transform_indices = @transform_1, window_bounds = array<i64: 128, 128>}, {pipeline_mode = #tpu.pipeline_mode<synchronous>, transform_indices = @transform_2, window_bounds = array<i64: 1, 128>}, {transform_indices = @transform_3, window_bounds = array<i64: 2, 8, 128>}, {transform_indices = @transform_4, window_bounds = array<i64: 2, 128>}]} {
    %c0 = arith.constant 0 : index
    %c0_0 = arith.constant 0 : index
    %c0_1 = arith.constant 0 : index
    %0 = vector.load %arg1[%c0, %c0_0, %c0_1] : memref<2x8x128xf32, #tpu.memory_space<vmem>>, vector<2x8x128xf32>
    %1 = vector.shape_cast %0 : vector<2x8x128xf32> to vector<16x128xf32>
    %c0_2 = arith.constant 0 : index
    %c0_3 = arith.constant 0 : index
    %2 = vector.load %arg2[%c0_2, %c0_3] : memref<128x128xf32, #tpu.memory_space<vmem>>, vector<128x128xf32>
    %cst = arith.constant dense<0.000000e+00> : vector<16x128xf32>
    %3 = tpu.matmul %1, %2, %cst {dimension_numbers = #tpu.dot_dimension_numbers<[1], [0], [0], [1], [0, 0, 1, 1], [], []>} : vector<16x128xf32>, vector<128x128xf32>, vector<16x128xf32> -> vector<16x128xf32>
    %c0_4 = arith.constant 0 : index
    %c0_5 = arith.constant 0 : index
    %4 = vector.load %arg3[%c0_4, %c0_5] : memref<1x128xf32, #tpu.memory_space<vmem>>, vector<1x128xf32>
    %5 = vector.broadcast %4 : vector<1x128xf32> to vector<16x128xf32>
    %6 = arith.addf %3, %5 : vector<16x128xf32>
    %7 = arith.mulf %6, %6 : vector<16x128xf32>
    %cst_6 = arith.constant dense<0.000000e+00> : vector<16xf32>
    %8 = vector.multi_reduction <add>, %7, %cst_6 [1] : vector<16x128xf32> to vector<16xf32>
    %9 = vector.shape_cast %8 : vector<16xf32> to vector<16x1xf32>
    %10 = math.sqrt %9 : vector<16x1xf32>
    %cst_7 = arith.constant 9.99999993E-9 : f32
    %11 = vector.broadcast %cst_7 : f32 to vector<16x1xf32>
    %12 = arith.addf %10, %11 : vector<16x1xf32>
    %13 = tpu.reciprocal %12 {approx = true} : vector<16x1xf32> -> vector<16x1xf32>
    %14 = vector.broadcast %13 : vector<16x1xf32> to vector<16x128xf32>
    %15 = arith.mulf %6, %14 : vector<16x128xf32>
    %16 = vector.shape_cast %15 : vector<16x128xf32> to vector<2x8x128xf32>
    %c0_8 = arith.constant 0 : index
    %c0_9 = arith.constant 0 : index
    %c0_10 = arith.constant 0 : index
    %17 = vector.load %arg4[%c0_8, %c0_9, %c0_10] : memref<2x8x128xf32, #tpu.memory_space<vmem>>, vector<2x8x128xf32>
    tpu.vector_store %arg4[%c0_8, %c0_9, %c0_10], %16 {strides = array<i32>} : memref<2x8x128xf32, #tpu.memory_space<vmem>>, vector<2x8x128xf32>,
    %cst_11 = arith.constant dense<0.000000e+00> : vector<2x128xf32>
    %18 = vector.multi_reduction <add>, %16, %cst_11 [1] : vector<2x8x128xf32> to vector<2x128xf32>
    %cst_12 = arith.constant 1.250000e-01 : f32
    %19 = vector.broadcast %cst_12 : f32 to vector<2x128xf32>
    %20 = arith.mulf %18, %19 : vector<2x128xf32>
    %c0_13 = arith.constant 0 : index
    %c0_14 = arith.constant 0 : index
    %21 = vector.load %arg5[%c0_13, %c0_14] : memref<2x128xf32, #tpu.memory_space<vmem>>, vector<2x128xf32>
    tpu.vector_store %arg5[%c0_13, %c0_14], %20 {strides = array<i32>} : memref<2x128xf32, #tpu.memory_space<vmem>>, vector<2x128xf32>,
    return
  }
  func.func @transform_0(%arg0: i32) -> (i32, i32, i32) {
    %c0_i32 = arith.constant 0 : i32
    %c0_i32_0 = arith.constant 0 : i32
    %c0_i32_1 = arith.constant 0 : i32
    return %arg0, %c0_i32, %c0_i32_0 : i32, i32, i32
  }
  func.func @transform_1(%arg0: i32) -> (i32, i32) {
    %c0_i32 = arith.constant 0 : i32
    %c0_i32_0 = arith.constant 0 : i32
    %c0_i32_1 = arith.constant 0 : i32
    return %c0_i32, %c0_i32_0 : i32, i32
  }
  func.func @transform_2(%arg0: i32) -> (i32, i32) {
    %c0_i32 = arith.constant 0 : i32
    %c0_i32_0 = arith.constant 0 : i32
    %c0_i32_1 = arith.constant 0 : i32
    return %c0_i32, %c0_i32_0 : i32, i32
  }
  func.func @transform_3(%arg0: i32) -> (i32, i32, i32) {
    %c0_i32 = arith.constant 0 : i32
    %c0_i32_0 = arith.constant 0 : i32
    %c0_i32_1 = arith.constant 0 : i32
    return %arg0, %c0_i32, %c0_i32_0 : i32, i32, i32
  }
  func.func @transform_4(%arg0: i32) -> (i32, i32) {
    %c0_i32 = arith.constant 0 : i32
    %c0_i32_0 = arith.constant 0 : i32
    return %arg0, %c0_i32 : i32, i32
  }
}

</mosaic_0001>

<llo_original>
// kernel: tpu_custom_call.1
$region0: #{tpu_custom_call.1}
  #allocation0 [shape = 'u32[]', space=smem, size = 0x4, offset = 0x4, fixed_abs, tag = 'smem constant byte address 0x4 - core index']
  #allocation1 [shape = 'u32[72,128]{1,0:T(1,128)}', space=vmem, size = 0x9000, scoped, tag = 'internal scratch']
  %s0 = inlined_call_operand.hbm [shape: f32[2,8,128], index: 0, kind: input, shape index: {}]
  %s1 = inlined_call_operand.hbm [shape: f32[128,128], index: 1, kind: input, shape index: {}]
  %s2 = inlined_call_operand.vmem [shape: f32[1,128], index: 2, kind: input, shape index: {}]
  %s3 = inlined_call_operand.hbm [shape: f32[2,8,128], index: 3, kind: output, shape index: {0}]
  %s4 = inlined_call_operand.hbm [shape: f32[2,128], index: 4, kind: output, shape index: {1}]
  %5 = xla_tuple %s3, %s4
  %s6 = sld [smem:[#allocation0]]
  $region38: #{tpu_custom_call.1} parent=0
    _
  %s8 = ssub.s32 1, %s6
  %s9 = scalar_select 0, %s8, %s6
  $region1: #{tpu_custom_call.1} parent=0
    #allocation2 [shape = 'u8[8192]{0}', space=vmem, size = 0x2000, scoped, tag = 'input window, operand 0, single buffered']
    #allocation3 [shape = 's32[1]{0}', space=sflag, size = 0x4, scoped, tag = 'scoped memory for tpu_custom_call.1']
    #allocation4 [shape = 's32[1]{0}', space=sflag, size = 0x4, scoped, tag = 'scoped memory for tpu_custom_call.1']
    #allocation5 [shape = 'u8[65536]{0}', space=vmem, size = 0x10000, scoped, tag = 'input window, operand 1, single buffered']
    #allocation6 [shape = 's32[1]{0}', space=sflag, size = 0x4, scoped, tag = 'scoped memory for tpu_custom_call.1']
    #allocation7 [shape = 'u8[8192]{0}', space=vmem, size = 0x2000, scoped, tag = 'output window, operand 0, single buffered']
    #allocation8 [shape = 'u8[1024]{0}', space=vmem, size = 0x400, scoped, tag = 'output window, operand 1, single buffered']
    #allocation9 [shape = 's32[1]{0}', space=sflag, size = 0x4, scoped, tag = 'scoped memory for tpu_custom_call.1']
    %10 = vsyncpa [#allocation3], 0
    %11 = vsyncpa [#allocation6], 0
    %12 = vsyncpa [#allocation4], 0
    %13 = vsyncpa [#allocation9], 0
    // Predicated region
    $region2: #{tpu_custom_call.1} parent=1 // pred_check
      _
    $region3: #{tpu_custom_call.1} parent=1 // pred_check_branch
      %15 = sbr.rel (0) target = $region5
    $region4: #{tpu_custom_call.1} parent=1 // pred_region
      %17 = vsyncadd [#allocation3], 0
      %s18 = sshll.u32 %s0, 4
      %s19 = int_to_ptr.hbm [resolvable:$true] %s18
      %s20 = sshll.u32 [#allocation2], 4
      %s21 = int_to_ptr.vmem [resolvable:$true] %s20
      %26 = dma.hbm_to_vmem [thread:$0]  %s19, 256, %s21, [#allocation3], 128, 128, 8
    $region5: #{tpu_custom_call.1} parent=1 // pred_fallthru
      _
    // Predicated region
    $region6: #{tpu_custom_call.1} parent=1 // pred_check
      _
    $region7: #{tpu_custom_call.1} parent=1 // pred_check_branch
      %28 = sbr.rel (0) target = $region9
    $region8: #{tpu_custom_call.1} parent=1 // pred_region
      %30 = vsyncadd [#allocation6], 0
      %s31 = sshll.u32 %s1, 4
      %s32 = int_to_ptr.hbm [resolvable:$true] %s31
      %s33 = sshll.u32 [#allocation5], 4
      %s34 = int_to_ptr.vmem [resolvable:$true] %s33
      %39 = dma.hbm_to_vmem [thread:$0]  %s32, 2048, %s34, [#allocation6], 128, 128, 8
    $region9: #{tpu_custom_call.1} parent=1 // pred_fallthru
      _
    // Predicated region
    $region10: #{tpu_custom_call.1} parent=1 // pred_check
      _
    $region11: #{tpu_custom_call.1} parent=1 // pred_check_branch
      %41 = sbr.rel (0) target = $region13
    $region12: #{tpu_custom_call.1} parent=1 // pred_region
      _
    $region13: #{tpu_custom_call.1} parent=1 // pred_fallthru
      _
    // Predicated region
    $region14: #{tpu_custom_call.1} parent=1 // pred_check
      _
    $region15: #{tpu_custom_call.1} parent=1 // pred_check_branch
      %43 = sbr.rel (0) target = $region17
    $region16: #{tpu_custom_call.1} parent=1 // pred_region
      %45 = dma.done [#allocation3], 256
    $region17: #{tpu_custom_call.1} parent=1 // pred_fallthru
      _
    // Predicated region
    $region18: #{tpu_custom_call.1} parent=1 // pred_check
      _
    $region19: #{tpu_custom_call.1} parent=1 // pred_check_branch
      %47 = sbr.rel (0) target = $region21
    $region20: #{tpu_custom_call.1} parent=1 // pred_region
      %49 = dma.done [#allocation6], 2048
    $region21: #{tpu_custom_call.1} parent=1 // pred_fallthru
      _
    %v50 = vld [vmem:[#allocation2] sm:$0xff]
    %v51 = vld [vmem:[#allocation2 + $0x8] sm:$0xff]
    %v52 = vld [vmem:[#allocation5] sm:$0xff]
    %v53 = vld [vmem:[#allocation5 + $0x8] sm:$0xff]
    %v54 = vld [vmem:[#allocation5 + $0x10] sm:$0xff]
    %v55 = vld [vmem:[#allocation5 + $0x18] sm:$0xff]
    %v56 = vld [vmem:[#allocation5 + $0x20] sm:$0xff]
    %v57 = vld [vmem:[#allocation5 + $0x28] sm:$0xff]
    %v58 = vld [vmem:[#allocation5 + $0x30] sm:$0xff]
    %v59 = vld [vmem:[#allocation5 + $0x38] sm:$0xff]
    %v60 = vld [vmem:[#allocation5 + $0x40] sm:$0xff]
    %v61 = vld [vmem:[#allocation5 + $0x48] sm:$0xff]
    %v62 = vld [vmem:[#allocation5 + $0x50] sm:$0xff]
    %v63 = vld [vmem:[#allocation5 + $0x58] sm:$0xff]
    %v64 = vld [vmem:[#allocation5 + $0x60] sm:$0xff]
    %v65 = vld [vmem:[#allocation5 + $0x68] sm:$0xff]
    %v66 = vld [vmem:[#allocation5 + $0x70] sm:$0xff]
    %v67 = vld [vmem:[#allocation5 + $0x78] sm:$0xff]
    %v68 = vld [vmem:[%s2] sm:$0x1]
    %v70 = vperm.slane %v68, 0
    %72 = vmatpush.msra.mxu0 %v67
    %73 = vmatpush.msra.mxu0 %v66
    %74 = vmatpush.msra.mxu0 %v65
    %75 = vmatpush.msra.mxu0 %v64
    %76 = vmatpush.msra.mxu0 %v63
    %77 = vmatpush.msra.mxu0 %v62
    %78 = vmatpush.msra.mxu0 %v61
    %79 = vmatpush.msra.mxu0 %v60
    %80 = vmatpush.msra.mxu0 %v59
    %81 = vmatpush.msra.mxu0 %v58
    %82 = vmatpush.msra.mxu0 %v57
    %83 = vmatpush.msra.mxu0 %v56
    %84 = vmatpush.msra.mxu0 %v55
    %85 = vmatpush.msra.mxu0 %v54
    %86 = vmatpush.msra.mxu0 %v53
    %87 = vmatpush.msra.mxu0 %v52
    %88 = vmatmul.f32.gmra.mxu0 %v50
    %v89 = vpop.f32.mrf.mxu0
    %v90 = vadd.f32 %v70, %v89
    %91 = vmatmul.f32.gmra.mxu0 %v51
    %v92 = vpop.f32.mrf.mxu0
    %v93 = vadd.f32 %v70, %v92
    %94 = vdwg.mxu0
    %v95 = vmul.f32 %v90, %v90
    %v96 = vmul.f32 %v93, %v93
    %97 = vadd.xlane.f32.xlu0 %v95
    %v98 = vpop.xlane.xlu0 %97
    %99 = vadd.xlane.f32.xlu0 %v96
    %v100 = vpop.xlane.xlu0 %99
    %v101 = vrsqrt.pop %v98
    %v102 = vmul.f32 %v101, %v98
    %v103 = vmul.f32 %v102, %v101
    %v104 = vmul.f32 0.5, %v103
    %v105 = vsub.f32 1.5, %v104
    %v106 = vmul.f32 %v101, %v105
    %v107 = vmul.f32 %v98, %v106
    %vm108 = vcmp.eq.f32.partialorder %v98, inf
    %v109 = vsel %vm108, %v98, %v107
    %vm110 = vcmp.eq.f32.partialorder %v98, 0.0
    %v111 = vand.u32 %v98, 2147483648
    %v112 = vsel %vm110, %v111, %v109
    %v113 = vrsqrt.pop %v100
    %v114 = vmul.f32 %v113, %v100
    %v115 = vmul.f32 %v114, %v113
    %v116 = vmul.f32 0.5, %v115
    %v117 = vsub.f32 1.5, %v116
    %v118 = vmul.f32 %v113, %v117
    %v119 = vmul.f32 %v100, %v118
    %vm120 = vcmp.eq.f32.partialorder %v100, inf
    %v121 = vsel %vm120, %v100, %v119
    %vm122 = vcmp.eq.f32.partialorder %v100, 0.0
    %v123 = vand.u32 %v100, 2147483648
    %v124 = vsel %vm122, %v123, %v121
    %v125 = vadd.f32 %v112, 1e-08
    %v126 = vadd.f32 %v124, 1e-08
    %v127 = vrcp.pop %v125
    %v128 = vrcp.pop %v126
    %v129 = vmul.f32 %v90, %v127
    %v130 = vmul.f32 %v93, %v128
    %131 = vst [vmem:[#allocation7] sm:$0xff] %v129
    %132 = vst [vmem:[#allocation7 + $0x8] sm:$0xff] %v130
    %v133 = vrot.slane %v129, 4
    %v134 = vadd.f32 %v129, %v133
    %v135 = vrot.slane %v134, 2
    %v136 = vadd.f32 %v134, %v135
    %v137 = vrot.slane %v136, 1
    %v138 = vadd.f32 %v136, %v137
    %v139 = vrot.slane %v130, 4
    %v140 = vadd.f32 %v130, %v139
    %v141 = vrot.slane %v140, 2
    %v142 = vadd.f32 %v140, %v141
    %v143 = vrot.slane %v142, 1
    %v144 = vadd.f32 %v142, %v143
    %v145 = vmul.f32 %v138, 0.125
    %v146 = vmul.f32 %v144, 0.125
    %vm149 = vcmask 1041409
    %v150 = vsel %vm149, %v146, %v145
    %152 = vst [vmem:[#allocation8] sm:$0x3] %v150
    // Predicated region
    $region22: #{tpu_custom_call.1} parent=1 // pred_check
      _
    $region23: #{tpu_custom_call.1} parent=1 // pred_check_branch
      %154 = sbr.rel (0) target = $region25
    $region24: #{tpu_custom_call.1} parent=1 // pred_region
      %156 = vsyncadd [#allocation4], 0
      %s157 = sshll.u32 [#allocation7], 4
      %s158 = int_to_ptr.vmem [resolvable:$true] %s157
      %s159 = sshll.u32 %s3, 4
      %s160 = int_to_ptr.hbm [resolvable:$true] %s159
      %165 = dma.vmem_to_hbm [thread:$0]  %s158, 256, %s160, [#allocation4], 128, 128, 8
    $region25: #{tpu_custom_call.1} parent=1 // pred_fallthru
      _
    // Predicated region
    $region26: #{tpu_custom_call.1} parent=1 // pred_check
      _
    $region27: #{tpu_custom_call.1} parent=1 // pred_check_branch
      %167 = sbr.rel (0) target = $region29
    $region28: #{tpu_custom_call.1} parent=1 // pred_region
      %169 = vsyncadd [#allocation9], 0
      %s171 = sshll.u32 [#allocation8], 4
      %s172 = int_to_ptr.vmem [resolvable:$true] %s171
      %s173 = sshll.u32 %s4, 4
      %s174 = int_to_ptr.hbm [resolvable:$true] %s173
      %176 = dma.vmem_to_hbm [thread:$0]  %s172, 32, %s174, [#allocation9]
    $region29: #{tpu_custom_call.1} parent=1 // pred_fallthru
      _
    // Predicated region
    $region30: #{tpu_custom_call.1} parent=1 // pred_check
      _
    $region31: #{tpu_custom_call.1} parent=1 // pred_check_branch
      %178 = sbr.rel (0) target = $region33
    $region32: #{tpu_custom_call.1} parent=1 // pred_region
      %180 = dma.done [#allocation4], 256
    $region33: #{tpu_custom_call.1} parent=1 // pred_fallthru
      _
    // Predicated region
    $region34: #{tpu_custom_call.1} parent=1 // pred_check
      _
    $region35: #{tpu_custom_call.1} parent=1 // pred_check_branch
      %182 = sbr.rel (0) target = $region37
    $region36: #{tpu_custom_call.1} parent=1 // pred_region
      %184 = dma.done [#allocation9], 32
    $region37: #{tpu_custom_call.1} parent=1 // pred_fallthru
      _
    %185 = vsyncpa [#allocation3], 1
    %186 = vsyncpa [#allocation6], 1
    %187 = vsyncpa [#allocation4], 1
    %188 = vsyncpa [#allocation9], 1

</llo_original>
